<compile_context>
chip_gen: v7x
topology: tpu7x:2x2x1
jax: 0.10.0
libtpu: 0.0.40
codegen_flags: <defaults>
</compile_context>

<pallas_src>
import functools

import jax
import jax.numpy as jnp
from jax.experimental import pallas as pl
from jax.experimental.pallas import tpu as pltpu


# ----------------------------------------------------------------------------
# Fused kernel: dists + one-hot gathers + stable logistic rank loss + mean
# ----------------------------------------------------------------------------
def _rank_loss_fused_kernel(i_ref, j_ref, k_ref, d_ref, p_ref, out_ref):
    T = i_ref.shape[0]
    C = d_ref.shape[0]

    # --- pairwise Euclidean distance matrix of the prototypes (MXU + VPU/EUP)
    x = p_ref[...].astype(jnp.float32)                            # (C, E)
    sq = jnp.sum(x * x, axis=-1, keepdims=True)                   # (C, 1)
    gram = jnp.dot(x, x.T, preferred_element_type=jnp.float32)    # (C, C)
    dists = jnp.sqrt(jnp.maximum(sq + sq.T - 2.0 * gram, 0.0))    # (C, C)

    # --- in-kernel one-hot gathers (MXU row-select + lane reduce), lane-dense
    lane = jax.lax.broadcasted_iota(jnp.int32, (T, C), 1)         # (T, C)
    oh_i = (lane == i_ref[...]).astype(jnp.float32)               # (T, C)
    sel_jk = ((lane == j_ref[...]).astype(jnp.float32)
              - (lane == k_ref[...]).astype(jnp.float32))         # (T, C)

    rows_D = jnp.dot(oh_i, d_ref[...].astype(jnp.float32),
                     preferred_element_type=jnp.float32)          # row t = D[i_t, :]
    rows_d = jnp.dot(oh_i, dists,
                     preferred_element_type=jnp.float32)          # row t = dists[i_t, :]

    # D[i,j] - D[i,k] and dists[i,j] - dists[i,k]
    d_diff = jnp.sum(rows_D * sel_jk, axis=-1, keepdims=True)     # (T, 1)
    diff = jnp.sum(rows_d * sel_jk, axis=-1, keepdims=True)       # (T, 1)

    s_hat = (d_diff > 0.0).astype(jnp.float32)                    # (T, 1)

    # --- stable logistic rank loss:
    #   original: l = s*(-log(1+e^-d)) + (1-s)*(-log(1+e^d)) ; loss = -mean(l)
    #   equals  : loss = mean( softplus(diff) - s*diff )
    # softplus via max(x,0) + log(1 + exp(-|x|)) : no overflow / 0*inf NaN.
    sp = jnp.maximum(diff, 0.0) + jnp.log(1.0 + jnp.exp(-jnp.abs(diff)))
    out_ref[0, 0] = jnp.mean(sp - s_hat * diff)


def _fused_rank_loss(i_idx, j_idx, k_idx, D, prototypes):
    T = i_idx.shape[0]
    C, E = prototypes.shape
    out = pl.pallas_call(
        _rank_loss_fused_kernel,
        out_shape=jax.ShapeDtypeStruct((1, 1), jnp.float32),
        in_specs=[
            pl.BlockSpec((T, 1), lambda: (0, 0)),
            pl.BlockSpec((T, 1), lambda: (0, 0)),
            pl.BlockSpec((T, 1), lambda: (0, 0)),
            pl.BlockSpec((C, C), lambda: (0, 0)),
            pl.BlockSpec((C, E), lambda: (0, 0)),
        ],
        out_specs=pl.BlockSpec(memory_space=pltpu.SMEM),
    )(i_idx, j_idx, k_idx, D, prototypes)
    return out[0, 0]


# ----------------------------------------------------------------------------
# RankLoss forward (dist='eucl')
# ----------------------------------------------------------------------------
@functools.partial(jax.jit, static_argnames=("n_triplets", "ignore_index"))
def rank_loss_forward(D, prototypes, key, *, n_triplets, ignore_index=None):
    C = D.shape[0]
    n_valid = C if ignore_index is None else C - 1

    # Direct sampling of distinct (i, j, k): same uniform distribution over
    # ordered distinct triples as torch.randperm(n)[:3], but only 3 randint
    # draws + a few elementwise fixups instead of T permutations.
    # TODO(synk): could move sampling fully in-kernel via pltpu.prng_random_bits.
    k1, k2, k3 = jax.random.split(key, 3)
    i0 = jax.random.randint(k1, (n_triplets,), 0, n_valid, dtype=jnp.int32)
    j0 = jax.random.randint(k2, (n_triplets,), 0, n_valid - 1, dtype=jnp.int32)
    j0 = j0 + (j0 >= i0).astype(jnp.int32)
    k0 = jax.random.randint(k3, (n_triplets,), 0, n_valid - 2, dtype=jnp.int32)
    lo = jnp.minimum(i0, j0)
    hi = jnp.maximum(i0, j0)
    k0 = k0 + (k0 >= lo).astype(jnp.int32)
    k0 = k0 + (k0 >= hi).astype(jnp.int32)

    if ignore_index is not None:
        # valid index m maps to class m + (m >= ignore_index)
        i0 = i0 + (i0 >= ignore_index).astype(jnp.int32)
        j0 = j0 + (j0 >= ignore_index).astype(jnp.int32)
        k0 = k0 + (k0 >= ignore_index).astype(jnp.int32)

    return _fused_rank_loss(
        i0.reshape(n_triplets, 1),
        j0.reshape(n_triplets, 1),
        k0.reshape(n_triplets, 1),
        D.astype(jnp.float32),
        prototypes.astype(jnp.float32),
    )


if __name__ == "__main__":
    num_classes = 16
    embed_dim = 32
    n_triplets = 128

    key = jax.random.PRNGKey(0)
    k_d, k_proto, k_trip = jax.random.split(key, 3)

    # Deterministic synthetic cost matrix D (symmetric, zero diagonal).
    A = jax.random.uniform(k_d, (num_classes, num_classes), dtype=jnp.float32)
    D = 0.5 * (A + A.T)
    D = D * (1.0 - jnp.eye(num_classes, dtype=jnp.float32))

    # Prototypes to embed (the module's forward input).
    prototypes = jax.random.normal(k_proto, (num_classes, embed_dim), dtype=jnp.float32)

    loss = rank_loss_forward(D, prototypes, k_trip, n_triplets=n_triplets, ignore_index=None)
    jax.block_until_ready(loss)

    # TODO(synk): Cosine_Mat variant (dist='cos') not implemented; only 'eucl' path.
    print("KERNEL_OK")
</pallas_src>

<mosaic_0001>
module attributes {stable_mosaic.version = 11 : i64} {
  func.func @_rank_loss_fused_kernel(%arg0: memref<128x1xi32, #tpu.memory_space<vmem>>, %arg1: memref<128x1xi32, #tpu.memory_space<vmem>>, %arg2: memref<128x1xi32, #tpu.memory_space<vmem>>, %arg3: memref<16x16xf32, #tpu.memory_space<vmem>>, %arg4: memref<16x32xf32, #tpu.memory_space<vmem>>, %arg5: memref<1x1xf32, #tpu.memory_space<smem>>) attributes {dimension_semantics = [], scalar_prefetch = 0 : i64, scratch_operands = 0 : i64, tpu.core_type = #tpu.core_type<tc>} {
    %c0 = arith.constant 0 : index
    %c0_0 = arith.constant 0 : index
    %0 = vector.load %arg4[%c0, %c0_0] : memref<16x32xf32, #tpu.memory_space<vmem>>, vector<16x32xf32>
    %1 = arith.mulf %0, %0 : vector<16x32xf32>
    %cst = arith.constant dense<0.000000e+00> : vector<16xf32>
    %2 = vector.multi_reduction <add>, %1, %cst [1] : vector<16x32xf32> to vector<16xf32>
    %3 = vector.shape_cast %2 : vector<16xf32> to vector<16x1xf32>
    %4 = tpu.transpose %0, [1, 0] : vector<16x32xf32> -> vector<32x16xf32>
    %cst_1 = arith.constant dense<0.000000e+00> : vector<16x16xf32>
    %5 = tpu.matmul %0, %4, %cst_1 {dimension_numbers = #tpu.dot_dimension_numbers<[1], [0], [0], [1], [0, 0, 1, 1], [], []>} : vector<16x32xf32>, vector<32x16xf32>, vector<16x16xf32> -> vector<16x16xf32>
    %6 = tpu.transpose %3, [1, 0] : vector<16x1xf32> -> vector<1x16xf32>
    %7 = vector.broadcast %3 : vector<16x1xf32> to vector<16x16xf32>
    %8 = vector.broadcast %6 : vector<1x16xf32> to vector<16x16xf32>
    %9 = arith.addf %7, %8 : vector<16x16xf32>
    %cst_2 = arith.constant 2.000000e+00 : f32
    %10 = vector.broadcast %cst_2 : f32 to vector<16x16xf32>
    %11 = arith.mulf %10, %5 : vector<16x16xf32>
    %12 = arith.subf %9, %11 : vector<16x16xf32>
    %cst_3 = arith.constant 0.000000e+00 : f32
    %13 = vector.broadcast %cst_3 : f32 to vector<16x16xf32>
    %14 = arith.maximumf %12, %13 : vector<16x16xf32>
    %15 = math.sqrt %14 : vector<16x16xf32>
    %16 = tpu.iota {dimensions = array<i32: 1>} : vector<128x16xi32>
    %c0_4 = arith.constant 0 : index
    %c0_5 = arith.constant 0 : index
    %17 = vector.load %arg0[%c0_4, %c0_5] : memref<128x1xi32, #tpu.memory_space<vmem>>, vector<128x1xi32>
    %18 = vector.broadcast %17 : vector<128x1xi32> to vector<128x16xi32>
    %19 = arith.cmpi eq, %16, %18 : vector<128x16xi32>
    %20 = arith.extui %19 : vector<128x16xi1> to vector<128x16xi32>
    %21 = arith.sitofp %20 : vector<128x16xi32> to vector<128x16xf32>
    %c0_6 = arith.constant 0 : index
    %c0_7 = arith.constant 0 : index
    %22 = vector.load %arg1[%c0_6, %c0_7] : memref<128x1xi32, #tpu.memory_space<vmem>>, vector<128x1xi32>
    %23 = vector.broadcast %22 : vector<128x1xi32> to vector<128x16xi32>
    %24 = arith.cmpi eq, %16, %23 : vector<128x16xi32>
    %25 = arith.extui %24 : vector<128x16xi1> to vector<128x16xi32>
    %26 = arith.sitofp %25 : vector<128x16xi32> to vector<128x16xf32>
    %c0_8 = arith.constant 0 : index
    %c0_9 = arith.constant 0 : index
    %27 = vector.load %arg2[%c0_8, %c0_9] : memref<128x1xi32, #tpu.memory_space<vmem>>, vector<128x1xi32>
    %28 = vector.broadcast %27 : vector<128x1xi32> to vector<128x16xi32>
    %29 = arith.cmpi eq, %16, %28 : vector<128x16xi32>
    %30 = arith.extui %29 : vector<128x16xi1> to vector<128x16xi32>
    %31 = arith.sitofp %30 : vector<128x16xi32> to vector<128x16xf32>
    %32 = arith.subf %26, %31 : vector<128x16xf32>
    %c0_10 = arith.constant 0 : index
    %c0_11 = arith.constant 0 : index
    %33 = vector.load %arg3[%c0_10, %c0_11] : memref<16x16xf32, #tpu.memory_space<vmem>>, vector<16x16xf32>
    %cst_12 = arith.constant dense<0.000000e+00> : vector<128x16xf32>
    %34 = tpu.matmul %21, %33, %cst_12 {dimension_numbers = #tpu.dot_dimension_numbers<[1], [0], [0], [1], [0, 0, 1, 1], [], []>} : vector<128x16xf32>, vector<16x16xf32>, vector<128x16xf32> -> vector<128x16xf32>
    %cst_13 = arith.constant dense<0.000000e+00> : vector<128x16xf32>
    %35 = tpu.matmul %21, %15, %cst_13 {dimension_numbers = #tpu.dot_dimension_numbers<[1], [0], [0], [1], [0, 0, 1, 1], [], []>} : vector<128x16xf32>, vector<16x16xf32>, vector<128x16xf32> -> vector<128x16xf32>
    %36 = arith.mulf %34, %32 : vector<128x16xf32>
    %cst_14 = arith.constant dense<0.000000e+00> : vector<128xf32>
    %37 = vector.multi_reduction <add>, %36, %cst_14 [1] : vector<128x16xf32> to vector<128xf32>
    %38 = vector.shape_cast %37 : vector<128xf32> to vector<128x1xf32>
    %39 = arith.mulf %35, %32 : vector<128x16xf32>
    %cst_15 = arith.constant dense<0.000000e+00> : vector<128xf32>
    %40 = vector.multi_reduction <add>, %39, %cst_15 [1] : vector<128x16xf32> to vector<128xf32>
    %41 = vector.shape_cast %40 : vector<128xf32> to vector<128x1xf32>
    %cst_16 = arith.constant 0.000000e+00 : f32
    %42 = vector.broadcast %cst_16 : f32 to vector<128x1xf32>
    %43 = arith.cmpf ogt, %38, %42 : vector<128x1xf32>
    %44 = arith.extui %43 : vector<128x1xi1> to vector<128x1xi32>
    %45 = arith.sitofp %44 : vector<128x1xi32> to vector<128x1xf32>
    %cst_17 = arith.constant 0.000000e+00 : f32
    %46 = vector.broadcast %cst_17 : f32 to vector<128x1xf32>
    %47 = arith.maximumf %41, %46 : vector<128x1xf32>
    %48 = math.absf %41 : vector<128x1xf32>
    %cst_18 = arith.constant 0.000000e+00 : f32
    %49 = vector.broadcast %cst_18 : f32 to vector<128x1xf32>
    %50 = arith.subf %49, %48 : vector<128x1xf32>
    %51 = math.exp %50 : vector<128x1xf32>
    %cst_19 = arith.constant 1.000000e+00 : f32
    %52 = vector.broadcast %cst_19 : f32 to vector<128x1xf32>
    %53 = arith.addf %52, %51 : vector<128x1xf32>
    %54 = math.log %53 : vector<128x1xf32>
    %55 = arith.addf %47, %54 : vector<128x1xf32>
    %56 = arith.mulf %45, %41 : vector<128x1xf32>
    %57 = arith.subf %55, %56 : vector<128x1xf32>
    %58 = vector.shape_cast %57 : vector<128x1xf32> to vector<1x128x1xf32>
    %cst_20 = arith.constant dense<0.000000e+00> : vector<1xf32>
    %59 = vector.multi_reduction <add>, %58, %cst_20 [1, 2] : vector<1x128x1xf32> to vector<1xf32>
    %60 = vector.shape_cast %59 : vector<1xf32> to vector<1x1x1xf32>
    %61 = vector.extract %60[0, 0, 0] : f32 from vector<1x1x1xf32>
    %cst_21 = arith.constant 1.280000e+02 : f32
    %62 = arith.divf %61, %cst_21 : f32
    %c0_22 = arith.constant 0 : index
    %c0_23 = arith.constant 0 : index
    %63 = memref.load %arg5[%c0_22, %c0_23] : memref<1x1xf32, #tpu.memory_space<smem>>
    memref.store %62, %arg5[%c0_22, %c0_23] : memref<1x1xf32, #tpu.memory_space<smem>>
    return
  }
}

</mosaic_0001>

<llo_original>
// kernel: rank_loss_forward.3
$region0: #{rank_loss_forward.3}
  #allocation0 [shape = 'u32[]', space=smem, size = 0x4, offset = 0x4, fixed_abs, tag = 'smem constant byte address 0x4 - core index']
  #allocation1 [shape = 'u32[144,128]{1,0:T(1,128)}', space=vmem, size = 0x12000, scoped, tag = 'internal scratch']
  %s0 = inlined_call_operand.vmem [shape: s32[128,1], index: 0, kind: input, shape index: {}]
  %s1 = inlined_call_operand.vmem [shape: s32[128,1], index: 1, kind: input, shape index: {}]
  %s2 = inlined_call_operand.vmem [shape: s32[128,1], index: 2, kind: input, shape index: {}]
  %s3 = inlined_call_operand.vmem [shape: f32[16,16], index: 3, kind: input, shape index: {}]
  %s4 = inlined_call_operand.vmem [shape: f32[16,32], index: 4, kind: input, shape index: {}]
  %s5 = inlined_call_operand.hbm [shape: f32[1,1], index: 5, kind: output, shape index: {}]
  %s6 = sld [smem:[#allocation0]]
  $region30: #{rank_loss_forward.3} parent=0
    _
  %s8 = ssub.s32 1, %s6
  %s9 = scalar_select 0, %s8, %s6
  $region1: #{rank_loss_forward.3} parent=0
    #allocation2 [shape = 'u8[512]{0}', space=smem, size = 0x200, scoped, tag = 'output window, operand 0, single buffered']
    #allocation3 [shape = 's32[1]{0}', space=sflag, size = 0x4, scoped, tag = 'scoped memory for rank_loss_forward.3']
    %10 = vsyncpa [#allocation3], 0
    // Predicated region
    $region2: #{rank_loss_forward.3} parent=1 // pred_check
      _
    $region3: #{rank_loss_forward.3} parent=1 // pred_check_branch
      %12 = sbr.rel (0) target = $region5
    $region4: #{rank_loss_forward.3} parent=1 // pred_region
      _
    $region5: #{rank_loss_forward.3} parent=1 // pred_fallthru
      _
    // Predicated region
    $region6: #{rank_loss_forward.3} parent=1 // pred_check
      _
    $region7: #{rank_loss_forward.3} parent=1 // pred_check_branch
      %14 = sbr.rel (0) target = $region9
    $region8: #{rank_loss_forward.3} parent=1 // pred_region
      _
    $region9: #{rank_loss_forward.3} parent=1 // pred_fallthru
      _
    // Predicated region
    $region10: #{rank_loss_forward.3} parent=1 // pred_check
      _
    $region11: #{rank_loss_forward.3} parent=1 // pred_check_branch
      %16 = sbr.rel (0) target = $region13
    $region12: #{rank_loss_forward.3} parent=1 // pred_region
      _
    $region13: #{rank_loss_forward.3} parent=1 // pred_fallthru
      _
    // Predicated region
    $region14: #{rank_loss_forward.3} parent=1 // pred_check
      _
    $region15: #{rank_loss_forward.3} parent=1 // pred_check_branch
      %18 = sbr.rel (0) target = $region17
    $region16: #{rank_loss_forward.3} parent=1 // pred_region
      _
    $region17: #{rank_loss_forward.3} parent=1 // pred_fallthru
      _
    // Predicated region
    $region18: #{rank_loss_forward.3} parent=1 // pred_check
      _
    $region19: #{rank_loss_forward.3} parent=1 // pred_check_branch
      %20 = sbr.rel (0) target = $region21
    $region20: #{rank_loss_forward.3} parent=1 // pred_region
      _
    $region21: #{rank_loss_forward.3} parent=1 // pred_fallthru
      _
    %v21 = vld [vmem:[%s4] sm:$0xff]
    %v22 = vld [vmem:[%s4 + $0x8] sm:$0xff]
    %v23 = vmul.f32 %v21, %v21
    %v24 = vmul.f32 %v22, %v22
    %vm25 = vcmask 261120
    %v26 = vsel %vm25, %v23, 0.0
    %27 = vadd.xlane.f32.xlu0 %v26
    %v28 = vpop.xlane.xlu0 %27
    %v29 = vsel %vm25, %v24, 0.0
    %30 = vadd.xlane.f32.xlu0 %v29
    %v31 = vpop.xlane.xlu0 %30
    %v33 = vsel %vm25, %v21, 0
    %v36 = vsel %vm25, %v22, 0
    %38 = vmatprep.subr.mxu0 0.0
    %39 = vmatpush1.xpose.msra.mxu0 %v33
    %40 = vmatprep.subr.mxu0 0.0
    %41 = vmatpush1.xpose.msra.mxu0 %v36
    %42 = vmatprep.subr.mxu0 0.0
    %43 = vmatpush1.xpose.msra.mxu0 0.0
    %44 = vmatprep.subr.mxu0 0.0
    %45 = vmatpush1.xpose.msra.mxu0 0.0
    %46 = vmatprep.subr.mxu0 0.0
    %47 = vmatpush1.xpose.msra.mxu0 0.0
    %48 = vmatprep.subr.mxu0 0.0
    %49 = vmatpush1.xpose.msra.mxu0 0.0
    %50 = vmatprep.subr.mxu0 0.0
    %51 = vmatpush1.xpose.msra.mxu0 0.0
    %52 = vmatprep.subr.mxu0 0.0
    %53 = vmatpush1.xpose.msra.mxu0 0.0
    %54 = vmatprep.subr.mxu0 0.0
    %55 = vmatpush1.xpose.msra.mxu0 0.0
    %56 = vmatprep.subr.mxu0 0.0
    %57 = vmatpush1.xpose.msra.mxu0 0.0
    %58 = vmatprep.subr.mxu0 0.0
    %59 = vmatpush1.xpose.msra.mxu0 0.0
    %60 = vmatprep.subr.mxu0 0.0
    %61 = vmatpush1.xpose.msra.mxu0 0.0
    %62 = vmatprep.subr.mxu0 0.0
    %63 = vmatpush1.xpose.msra.mxu0 0.0
    %64 = vmatprep.subr.mxu0 0.0
    %65 = vmatpush1.xpose.msra.mxu0 0.0
    %66 = vmatprep.subr.mxu0 0.0
    %67 = vmatpush1.xpose.msra.mxu0 0.0
    %68 = vmatprep.subr.mxu0 0.0
    %69 = vmatpush1.xpose.msra.mxu0 0.0
    %70 = vmatprep.subr.mxu0 0.0
    %71 = vmatpush1.xpose.msra.mxu0 0.0
    %72 = vmatprep.subr.mxu0 0.0
    %73 = vmatpush1.xpose.msra.mxu0 0.0
    %74 = vmatprep.subr.mxu0 0.0
    %75 = vmatpush1.xpose.msra.mxu0 0.0
    %76 = vmatprep.subr.mxu0 0.0
    %77 = vmatpush1.xpose.msra.mxu0 0.0
    %78 = vmatprep.subr.mxu0 0.0
    %79 = vmatpush1.xpose.msra.mxu0 0.0
    %80 = vmatprep.subr.mxu0 0.0
    %81 = vmatpush1.xpose.msra.mxu0 0.0
    %82 = vmatprep.subr.mxu0 0.0
    %83 = vmatpush1.xpose.msra.mxu0 0.0
    %84 = vmatprep.subr.mxu0 0.0
    %85 = vmatpush1.xpose.msra.mxu0 0.0
    %86 = vmatprep.subr.mxu0 0.0
    %87 = vmatpush1.xpose.msra.mxu0 0.0
    %88 = vmatprep.subr.mxu0 0.0
    %89 = vmatpush1.xpose.msra.mxu0 0.0
    %90 = vmatprep.subr.mxu0 0.0
    %91 = vmatpush1.xpose.msra.mxu0 0.0
    %92 = vmatprep.subr.mxu0 0.0
    %93 = vmatpush1.xpose.msra.mxu0 0.0
    %94 = vmatprep.subr.mxu0 0.0
    %95 = vmatpush1.xpose.msra.mxu0 0.0
    %96 = vmatprep.subr.mxu0 0.0
    %97 = vmatpush1.xpose.msra.mxu0 0.0
    %98 = vmatprep.subr.mxu0 0.0
    %99 = vmatpush1.xpose.msra.mxu0 0.0
    %100 = vmatprep.subr.mxu0 0.0
    %101 = vmatpush1.xpose.msra.mxu0 0.0
    %102 = vmatprep.mubr.f32.mxu0 0.0
    %103 = vmatmul.mubr.f32.gmra.mrb[0].mxu0 %v33
    %v104 = vpop.f32.mrb[0].mxu0
    %v105 = vadd.f32 0.0, %v104
    %v106 = vpop.f32.mrb[0].mxu0
    %107 = vmatprep.mubr.f32.mxu0 0.0
    %108 = vmatmul.mubr.f32.gmra.mrb[0].mxu0 %v36
    %v109 = vpop.f32.mrb[0].mxu0
    %v110 = vadd.f32 0.0, %v109
    %v111 = vpop.f32.mrb[0].mxu0
    %112 = vdwg.mxu0
    %113 = vxpose.xlu0.b32.start [1/16] %v28, 128
    %114 = vxpose.xlu0.b32.cont [2/16] %v31, 128
    %115 = vxpose.xlu0.b32.cont [3/16] 0.0, 128
    %116 = vxpose.xlu0.b32.cont [4/16] 0.0, 128
    %117 = vxpose.xlu0.b32.cont [5/16] 0.0, 128
    %118 = vxpose.xlu0.b32.cont [6/16] 0.0, 128
    %119 = vxpose.xlu0.b32.cont [7/16] 0.0, 128
    %120 = vxpose.xlu0.b32.cont [8/16] 0.0, 128
    %121 = vxpose.xlu0.b32.cont [9/16] 0.0, 128
    %122 = vxpose.xlu0.b32.cont [10/16] 0.0, 128
    %123 = vxpose.xlu0.b32.cont [11/16] 0.0, 128
    %124 = vxpose.xlu0.b32.cont [12/16] 0.0, 128
    %125 = vxpose.xlu0.b32.cont [13/16] 0.0, 128
    %126 = vxpose.xlu0.b32.cont [14/16] 0.0, 128
    %127 = vxpose.xlu0.b32.cont [15/16] 0.0, 128
    %128 = vxpose.xlu0.b32.end [16/16] 0.0, 128
    %v129 = vpop.trf.xlu0
    %v130 = vpop.trf.xlu0
    %v131 = vpop.trf.xlu0
    %v132 = vpop.trf.xlu0
    %v133 = vpop.trf.xlu0
    %v134 = vpop.trf.xlu0
    %v135 = vpop.trf.xlu0
    %v136 = vpop.trf.xlu0
    %v137 = vpop.trf.xlu0
    %v138 = vpop.trf.xlu0
    %v139 = vpop.trf.xlu0
    %v140 = vpop.trf.xlu0
    %v141 = vpop.trf.xlu0
    %v142 = vpop.trf.xlu0
    %v143 = vpop.trf.xlu0
    %v144 = vpop.trf.xlu0
    %v145 = vlaneseq
    %v146 = vshrl.u32 %v145, 7
    %v147 = vsub.s32 0, %v146
    %v148 = vrot.slane %v129, %v147
    %v149 = vadd.f32 %v28, %v148
    %v150 = vadd.f32 %v31, %v148
    %v151 = vmul.f32 %v105, 2.0
    %v152 = vmul.f32 %v110, 2.0
    %v153 = vsub.f32 %v149, %v151
    %v154 = vsub.f32 %v150, %v152
    %v155 = vmax.f32 %v153, 0.0
    %v156 = vmax.f32 %v154, 0.0
    %v157 = vrsqrt.pop %v155
    %v158 = vmul.f32 %v155, %v157
    %vm159 = vcmp.eq.f32.partialorder %v155, inf
    %v160 = vsel %vm159, %v155, %v158
    %vm161 = vcmp.eq.f32.partialorder %v155, 0.0
    %v162 = vand.u32 %v155, 2147483648
    %v163 = vsel %vm161, %v162, %v160
    %v164 = vrsqrt.pop %v156
    %v165 = vmul.f32 %v156, %v164
    %vm166 = vcmp.eq.f32.partialorder %v156, inf
    %v167 = vsel %vm166, %v156, %v165
    %vm168 = vcmp.eq.f32.partialorder %v156, 0.0
    %v169 = vand.u32 %v156, 2147483648
    %v170 = vsel %vm168, %v169, %v167
    %v171 = vlaneseq
    %v172 = vand.u32 %v171, 127
    %v173 = vld [vmem:[%s0] sm:$0xff]
    %v174 = vld [vmem:[%s0 + $0x8] sm:$0xff]
    %v175 = vld [vmem:[%s0 + $0x10] sm:$0xff]
    %v176 = vld [vmem:[%s0 + $0x18] sm:$0xff]
    %v177 = vld [vmem:[%s0 + $0x20] sm:$0xff]
    %v178 = vld [vmem:[%s0 + $0x28] sm:$0xff]
    %v179 = vld [vmem:[%s0 + $0x30] sm:$0xff]
    %v180 = vld [vmem:[%s0 + $0x38] sm:$0xff]
    %v181 = vld [vmem:[%s0 + $0x40] sm:$0xff]
    %v182 = vld [vmem:[%s0 + $0x48] sm:$0xff]
    %v183 = vld [vmem:[%s0 + $0x50] sm:$0xff]
    %v184 = vld [vmem:[%s0 + $0x58] sm:$0xff]
    %v185 = vld [vmem:[%s0 + $0x60] sm:$0xff]
    %v186 = vld [vmem:[%s0 + $0x68] sm:$0xff]
    %v187 = vld [vmem:[%s0 + $0x70] sm:$0xff]
    %v188 = vld [vmem:[%s0 + $0x78] sm:$0xff]
    %189 = vset.pattern.permute.xlu0 0
    %190 = vperm.xlu0 %189, %v173
    %v191 = vpop.permute.xlu0 %190
    %192 = vset.pattern.permute.xlu0 0
    %193 = vperm.xlu0 %192, %v174
    %v194 = vpop.permute.xlu0 %193
    %195 = vset.pattern.permute.xlu0 0
    %196 = vperm.xlu0 %195, %v175
    %v197 = vpop.permute.xlu0 %196
    %198 = vset.pattern.permute.xlu0 0
    %199 = vperm.xlu0 %198, %v176
    %v200 = vpop.permute.xlu0 %199
    %201 = vset.pattern.permute.xlu0 0
    %202 = vperm.xlu0 %201, %v177
    %v203 = vpop.permute.xlu0 %202
    %204 = vset.pattern.permute.xlu0 0
    %205 = vperm.xlu0 %204, %v178
    %v206 = vpop.permute.xlu0 %205
    %207 = vset.pattern.permute.xlu0 0
    %208 = vperm.xlu0 %207, %v179
    %v209 = vpop.permute.xlu0 %208
    %210 = vset.pattern.permute.xlu0 0
    %211 = vperm.xlu0 %210, %v180
    %v212 = vpop.permute.xlu0 %211
    %213 = vset.pattern.permute.xlu0 0
    %214 = vperm.xlu0 %213, %v181
    %v215 = vpop.permute.xlu0 %214
    %216 = vset.pattern.permute.xlu0 0
    %217 = vperm.xlu0 %216, %v182
    %v218 = vpop.permute.xlu0 %217
    %219 = vset.pattern.permute.xlu0 0
    %220 = vperm.xlu0 %219, %v183
    %v221 = vpop.permute.xlu0 %220
    %222 = vset.pattern.permute.xlu0 0
    %223 = vperm.xlu0 %222, %v184
    %v224 = vpop.permute.xlu0 %223
    %225 = vset.pattern.permute.xlu0 0
    %226 = vperm.xlu0 %225, %v185
    %v227 = vpop.permute.xlu0 %226
    %228 = vset.pattern.permute.xlu0 0
    %229 = vperm.xlu0 %228, %v186
    %v230 = vpop.permute.xlu0 %229
    %231 = vset.pattern.permute.xlu0 0
    %232 = vperm.xlu0 %231, %v187
    %v233 = vpop.permute.xlu0 %232
    %234 = vset.pattern.permute.xlu0 0
    %235 = vperm.xlu0 %234, %v188
    %v236 = vpop.permute.xlu0 %235
    %vm237 = vcmp.eq.s32.totalorder %v172, %v191
    %vm238 = vcmp.eq.s32.totalorder %v172, %v194
    %vm239 = vcmp.eq.s32.totalorder %v172, %v197
    %vm240 = vcmp.eq.s32.totalorder %v172, %v200
    %vm241 = vcmp.eq.s32.totalorder %v172, %v203
    %vm242 = vcmp.eq.s32.totalorder %v172, %v206
    %vm243 = vcmp.eq.s32.totalorder %v172, %v209
    %vm244 = vcmp.eq.s32.totalorder %v172, %v212
    %vm245 = vcmp.eq.s32.totalorder %v172, %v215
    %vm246 = vcmp.eq.s32.totalorder %v172, %v218
    %vm247 = vcmp.eq.s32.totalorder %v172, %v221
    %vm248 = vcmp.eq.s32.totalorder %v172, %v224
    %vm249 = vcmp.eq.s32.totalorder %v172, %v227
    %vm250 = vcmp.eq.s32.totalorder %v172, %v230
    %vm251 = vcmp.eq.s32.totalorder %v172, %v233
    %vm252 = vcmp.eq.s32.totalorder %v172, %v236
    %v253 = vsel %vm237, 1, 0
    %v254 = vsel %vm238, 1, 0
    %v255 = vsel %vm239, 1, 0
    %v256 = vsel %vm240, 1, 0
    %v257 = vsel %vm241, 1, 0
    %v258 = vsel %vm242, 1, 0
    %v259 = vsel %vm243, 1, 0
    %v260 = vsel %vm244, 1, 0
    %v261 = vsel %vm245, 1, 0
    %v262 = vsel %vm246, 1, 0
    %v263 = vsel %vm247, 1, 0
    %v264 = vsel %vm248, 1, 0
    %v265 = vsel %vm249, 1, 0
    %v266 = vsel %vm250, 1, 0
    %v267 = vsel %vm251, 1, 0
    %v268 = vsel %vm252, 1, 0
    %v269 = vcvt.s32.f32 %v253
    %v270 = vcvt.s32.f32 %v254
    %v271 = vcvt.s32.f32 %v255
    %v272 = vcvt.s32.f32 %v256
    %v273 = vcvt.s32.f32 %v257
    %v274 = vcvt.s32.f32 %v258
    %v275 = vcvt.s32.f32 %v259
    %v276 = vcvt.s32.f32 %v260
    %v277 = vcvt.s32.f32 %v261
    %v278 = vcvt.s32.f32 %v262
    %v279 = vcvt.s32.f32 %v263
    %v280 = vcvt.s32.f32 %v264
    %v281 = vcvt.s32.f32 %v265
    %v282 = vcvt.s32.f32 %v266
    %v283 = vcvt.s32.f32 %v267
    %v284 = vcvt.s32.f32 %v268
    %v285 = vld [vmem:[%s1] sm:$0xff]
    %v286 = vld [vmem:[%s1 + $0x8] sm:$0xff]
    %v287 = vld [vmem:[%s1 + $0x10] sm:$0xff]
    %v288 = vld [vmem:[%s1 + $0x18] sm:$0xff]
    %v289 = vld [vmem:[%s1 + $0x20] sm:$0xff]
    %v290 = vld [vmem:[%s1 + $0x28] sm:$0xff]
    %v291 = vld [vmem:[%s1 + $0x30] sm:$0xff]
    %v292 = vld [vmem:[%s1 + $0x38] sm:$0xff]
    %v293 = vld [vmem:[%s1 + $0x40] sm:$0xff]
    %v294 = vld [vmem:[%s1 + $0x48] sm:$0xff]
    %v295 = vld [vmem:[%s1 + $0x50] sm:$0xff]
    %v296 = vld [vmem:[%s1 + $0x58] sm:$0xff]
    %v297 = vld [vmem:[%s1 + $0x60] sm:$0xff]
    %v298 = vld [vmem:[%s1 + $0x68] sm:$0xff]
    %v299 = vld [vmem:[%s1 + $0x70] sm:$0xff]
    %v300 = vld [vmem:[%s1 + $0x78] sm:$0xff]
    %301 = vset.pattern.permute.xlu0 0
    %302 = vperm.xlu0 %301, %v285
    %v303 = vpop.permute.xlu0 %302
    %304 = vset.pattern.permute.xlu0 0
    %305 = vperm.xlu0 %304, %v286
    %v306 = vpop.permute.xlu0 %305
    %307 = vset.pattern.permute.xlu0 0
    %308 = vperm.xlu0 %307, %v287
    %v309 = vpop.permute.xlu0 %308
    %310 = vset.pattern.permute.xlu0 0
    %311 = vperm.xlu0 %310, %v288
    %v312 = vpop.permute.xlu0 %311
    %313 = vset.pattern.permute.xlu0 0
    %314 = vperm.xlu0 %313, %v289
    %v315 = vpop.permute.xlu0 %314
    %316 = vset.pattern.permute.xlu0 0
    %317 = vperm.xlu0 %316, %v290
    %v318 = vpop.permute.xlu0 %317
    %319 = vset.pattern.permute.xlu0 0
    %320 = vperm.xlu0 %319, %v291
    %v321 = vpop.permute.xlu0 %320
    %322 = vset.pattern.permute.xlu0 0
    %323 = vperm.xlu0 %322, %v292
    %v324 = vpop.permute.xlu0 %323
    %325 = vset.pattern.permute.xlu0 0
    %326 = vperm.xlu0 %325, %v293
    %v327 = vpop.permute.xlu0 %326
    %328 = vset.pattern.permute.xlu0 0
    %329 = vperm.xlu0 %328, %v294
    %v330 = vpop.permute.xlu0 %329
    %331 = vset.pattern.permute.xlu0 0
    %332 = vperm.xlu0 %331, %v295
    %v333 = vpop.permute.xlu0 %332
    %334 = vset.pattern.permute.xlu0 0
    %335 = vperm.xlu0 %334, %v296
    %v336 = vpop.permute.xlu0 %335
    %337 = vset.pattern.permute.xlu0 0
    %338 = vperm.xlu0 %337, %v297
    %v339 = vpop.permute.xlu0 %338
    %340 = vset.pattern.permute.xlu0 0
    %341 = vperm.xlu0 %340, %v298
    %v342 = vpop.permute.xlu0 %341
    %343 = vset.pattern.permute.xlu0 0
    %344 = vperm.xlu0 %343, %v299
    %v345 = vpop.permute.xlu0 %344
    %346 = vset.pattern.permute.xlu0 0
    %347 = vperm.xlu0 %346, %v300
    %v348 = vpop.permute.xlu0 %347
    %vm349 = vcmp.eq.s32.totalorder %v172, %v303
    %vm350 = vcmp.eq.s32.totalorder %v172, %v306
    %vm351 = vcmp.eq.s32.totalorder %v172, %v309
    %vm352 = vcmp.eq.s32.totalorder %v172, %v312
    %vm353 = vcmp.eq.s32.totalorder %v172, %v315
    %vm354 = vcmp.eq.s32.totalorder %v172, %v318
    %vm355 = vcmp.eq.s32.totalorder %v172, %v321
    %vm356 = vcmp.eq.s32.totalorder %v172, %v324
    %vm357 = vcmp.eq.s32.totalorder %v172, %v327
    %vm358 = vcmp.eq.s32.totalorder %v172, %v330
    %vm359 = vcmp.eq.s32.totalorder %v172, %v333
    %vm360 = vcmp.eq.s32.totalorder %v172, %v336
    %vm361 = vcmp.eq.s32.totalorder %v172, %v339
    %vm362 = vcmp.eq.s32.totalorder %v172, %v342
    %vm363 = vcmp.eq.s32.totalorder %v172, %v345
    %vm364 = vcmp.eq.s32.totalorder %v172, %v348
    %v365 = vsel %vm349, 1, 0
    %v366 = vsel %vm350, 1, 0
    %v367 = vsel %vm351, 1, 0
    %v368 = vsel %vm352, 1, 0
    %v369 = vsel %vm353, 1, 0
    %v370 = vsel %vm354, 1, 0
    %v371 = vsel %vm355, 1, 0
    %v372 = vsel %vm356, 1, 0
    %v373 = vsel %vm357, 1, 0
    %v374 = vsel %vm358, 1, 0
    %v375 = vsel %vm359, 1, 0
    %v376 = vsel %vm360, 1, 0
    %v377 = vsel %vm361, 1, 0
    %v378 = vsel %vm362, 1, 0
    %v379 = vsel %vm363, 1, 0
    %v380 = vsel %vm364, 1, 0
    %v381 = vcvt.s32.f32 %v365
    %v382 = vcvt.s32.f32 %v366
    %v383 = vcvt.s32.f32 %v367
    %v384 = vcvt.s32.f32 %v368
    %v385 = vcvt.s32.f32 %v369
    %v386 = vcvt.s32.f32 %v370
    %v387 = vcvt.s32.f32 %v371
    %v388 = vcvt.s32.f32 %v372
    %v389 = vcvt.s32.f32 %v373
    %v390 = vcvt.s32.f32 %v374
    %v391 = vcvt.s32.f32 %v375
    %v392 = vcvt.s32.f32 %v376
    %v393 = vcvt.s32.f32 %v377
    %v394 = vcvt.s32.f32 %v378
    %v395 = vcvt.s32.f32 %v379
    %v396 = vcvt.s32.f32 %v380
    %v397 = vld [vmem:[%s2] sm:$0xff]
    %v398 = vld [vmem:[%s2 + $0x8] sm:$0xff]
    %v399 = vld [vmem:[%s2 + $0x10] sm:$0xff]
    %v400 = vld [vmem:[%s2 + $0x18] sm:$0xff]
    %v401 = vld [vmem:[%s2 + $0x20] sm:$0xff]
    %v402 = vld [vmem:[%s2 + $0x28] sm:$0xff]
    %v403 = vld [vmem:[%s2 + $0x30] sm:$0xff]
    %v404 = vld [vmem:[%s2 + $0x38] sm:$0xff]
    %v405 = vld [vmem:[%s2 + $0x40] sm:$0xff]
    %v406 = vld [vmem:[%s2 + $0x48] sm:$0xff]
    %v407 = vld [vmem:[%s2 + $0x50] sm:$0xff]
    %v408 = vld [vmem:[%s2 + $0x58] sm:$0xff]
    %v409 = vld [vmem:[%s2 + $0x60] sm:$0xff]
    %v410 = vld [vmem:[%s2 + $0x68] sm:$0xff]
    %v411 = vld [vmem:[%s2 + $0x70] sm:$0xff]
    %v412 = vld [vmem:[%s2 + $0x78] sm:$0xff]
    %413 = vset.pattern.permute.xlu0 0
    %414 = vperm.xlu0 %413, %v397
    %v415 = vpop.permute.xlu0 %414
    %416 = vset.pattern.permute.xlu0 0
    %417 = vperm.xlu0 %416, %v398
    %v418 = vpop.permute.xlu0 %417
    %419 = vset.pattern.permute.xlu0 0
    %420 = vperm.xlu0 %419, %v399
    %v421 = vpop.permute.xlu0 %420
    %422 = vset.pattern.permute.xlu0 0
    %423 = vperm.xlu0 %422, %v400
    %v424 = vpop.permute.xlu0 %423
    %425 = vset.pattern.permute.xlu0 0
    %426 = vperm.xlu0 %425, %v401
    %v427 = vpop.permute.xlu0 %426
    %428 = vset.pattern.permute.xlu0 0
    %429 = vperm.xlu0 %428, %v402
    %v430 = vpop.permute.xlu0 %429
    %431 = vset.pattern.permute.xlu0 0
    %432 = vperm.xlu0 %431, %v403
    %v433 = vpop.permute.xlu0 %432
    %434 = vset.pattern.permute.xlu0 0
    %435 = vperm.xlu0 %434, %v404
    %v436 = vpop.permute.xlu0 %435
    %437 = vset.pattern.permute.xlu0 0
    %438 = vperm.xlu0 %437, %v405
    %v439 = vpop.permute.xlu0 %438
    %440 = vset.pattern.permute.xlu0 0
    %441 = vperm.xlu0 %440, %v406
    %v442 = vpop.permute.xlu0 %441
    %443 = vset.pattern.permute.xlu0 0
    %444 = vperm.xlu0 %443, %v407
    %v445 = vpop.permute.xlu0 %444
    %446 = vset.pattern.permute.xlu0 0
    %447 = vperm.xlu0 %446, %v408
    %v448 = vpop.permute.xlu0 %447
    %449 = vset.pattern.permute.xlu0 0
    %450 = vperm.xlu0 %449, %v409
    %v451 = vpop.permute.xlu0 %450
    %452 = vset.pattern.permute.xlu0 0
    %453 = vperm.xlu0 %452, %v410
    %v454 = vpop.permute.xlu0 %453
    %455 = vset.pattern.permute.xlu0 0
    %456 = vperm.xlu0 %455, %v411
    %v457 = vpop.permute.xlu0 %456
    %458 = vset.pattern.permute.xlu0 0
    %459 = vperm.xlu0 %458, %v412
    %v460 = vpop.permute.xlu0 %459
    %vm461 = vcmp.eq.s32.totalorder %v172, %v415
    %vm462 = vcmp.eq.s32.totalorder %v172, %v418
    %vm463 = vcmp.eq.s32.totalorder %v172, %v421
    %vm464 = vcmp.eq.s32.totalorder %v172, %v424
    %vm465 = vcmp.eq.s32.totalorder %v172, %v427
    %vm466 = vcmp.eq.s32.totalorder %v172, %v430
    %vm467 = vcmp.eq.s32.totalorder %v172, %v433
    %vm468 = vcmp.eq.s32.totalorder %v172, %v436
    %vm469 = vcmp.eq.s32.totalorder %v172, %v439
    %vm470 = vcmp.eq.s32.totalorder %v172, %v442
    %vm471 = vcmp.eq.s32.totalorder %v172, %v445
    %vm472 = vcmp.eq.s32.totalorder %v172, %v448
    %vm473 = vcmp.eq.s32.totalorder %v172, %v451
    %vm474 = vcmp.eq.s32.totalorder %v172, %v454
    %vm475 = vcmp.eq.s32.totalorder %v172, %v457
    %vm476 = vcmp.eq.s32.totalorder %v172, %v460
    %v477 = vsel %vm461, 1, 0
    %v478 = vsel %vm462, 1, 0
    %v479 = vsel %vm463, 1, 0
    %v480 = vsel %vm464, 1, 0
    %v481 = vsel %vm465, 1, 0
    %v482 = vsel %vm466, 1, 0
    %v483 = vsel %vm467, 1, 0
    %v484 = vsel %vm468, 1, 0
    %v485 = vsel %vm469, 1, 0
    %v486 = vsel %vm470, 1, 0
    %v487 = vsel %vm471, 1, 0
    %v488 = vsel %vm472, 1, 0
    %v489 = vsel %vm473, 1, 0
    %v490 = vsel %vm474, 1, 0
    %v491 = vsel %vm475, 1, 0
    %v492 = vsel %vm476, 1, 0
    %v493 = vcvt.s32.f32 %v477
    %v494 = vcvt.s32.f32 %v478
    %v495 = vcvt.s32.f32 %v479
    %v496 = vcvt.s32.f32 %v480
    %v497 = vcvt.s32.f32 %v481
    %v498 = vcvt.s32.f32 %v482
    %v499 = vcvt.s32.f32 %v483
    %v500 = vcvt.s32.f32 %v484
    %v501 = vcvt.s32.f32 %v485
    %v502 = vcvt.s32.f32 %v486
    %v503 = vcvt.s32.f32 %v487
    %v504 = vcvt.s32.f32 %v488
    %v505 = vcvt.s32.f32 %v489
    %v506 = vcvt.s32.f32 %v490
    %v507 = vcvt.s32.f32 %v491
    %v508 = vcvt.s32.f32 %v492
    %v509 = vsub.f32 %v381, %v493
    %v510 = vsub.f32 %v382, %v494
    %v511 = vsub.f32 %v383, %v495
    %v512 = vsub.f32 %v384, %v496
    %v513 = vsub.f32 %v385, %v497
    %v514 = vsub.f32 %v386, %v498
    %v515 = vsub.f32 %v387, %v499
    %v516 = vsub.f32 %v388, %v500
    %v517 = vsub.f32 %v389, %v501
    %v518 = vsub.f32 %v390, %v502
    %v519 = vsub.f32 %v391, %v503
    %v520 = vsub.f32 %v392, %v504
    %v521 = vsub.f32 %v393, %v505
    %v522 = vsub.f32 %v394, %v506
    %v523 = vsub.f32 %v395, %v507
    %v524 = vsub.f32 %v396, %v508
    %v525 = vld [vmem:[%s3] sm:$0xff]
    %v526 = vld [vmem:[%s3 + $0x8] sm:$0xff]
    %vm527 = vcmask 130048
    %v529 = vsel %vm527, %v269, 0
    %v532 = vsel %vm527, %v270, 0
    %v535 = vsel %vm527, %v271, 0
    %v538 = vsel %vm527, %v272, 0
    %v541 = vsel %vm527, %v273, 0
    %v544 = vsel %vm527, %v274, 0
    %v547 = vsel %vm527, %v275, 0
    %v550 = vsel %vm527, %v276, 0
    %v553 = vsel %vm527, %v277, 0
    %v556 = vsel %vm527, %v278, 0
    %v559 = vsel %vm527, %v279, 0
    %v562 = vsel %vm527, %v280, 0
    %v565 = vsel %vm527, %v281, 0
    %v568 = vsel %vm527, %v282, 0
    %v571 = vsel %vm527, %v283, 0
    %v574 = vsel %vm527, %v284, 0
    %576 = vmatprep.subr.mxu0 0.0
    %577 = vmatpush1.msra.mxu0 %v525
    %578 = vmatprep.subr.mxu0 0.0
    %579 = vmatpush1.msra.mxu0 %v526
    %580 = vmatprep.subr.mxu0 0.0
    %581 = vmatpush1.msra.mxu0 0.0
    %582 = vmatprep.subr.mxu0 0.0
    %583 = vmatpush1.msra.mxu0 0.0
    %584 = vmatprep.subr.mxu0 0.0
    %585 = vmatpush1.msra.mxu0 0.0
    %586 = vmatprep.subr.mxu0 0.0
    %587 = vmatpush1.msra.mxu0 0.0
    %588 = vmatprep.subr.mxu0 0.0
    %589 = vmatpush1.msra.mxu0 0.0
    %590 = vmatprep.subr.mxu0 0.0
    %591 = vmatpush1.msra.mxu0 0.0
    %592 = vmatprep.subr.mxu0 0.0
    %593 = vmatpush1.msra.mxu0 0.0
    %594 = vmatprep.subr.mxu0 0.0
    %595 = vmatpush1.msra.mxu0 0.0
    %596 = vmatprep.subr.mxu0 0.0
    %597 = vmatpush1.msra.mxu0 0.0
    %598 = vmatprep.subr.mxu0 0.0
    %599 = vmatpush1.msra.mxu0 0.0
    %600 = vmatprep.subr.mxu0 0.0
    %601 = vmatpush1.msra.mxu0 0.0
    %602 = vmatprep.subr.mxu0 0.0
    %603 = vmatpush1.msra.mxu0 0.0
    %604 = vmatprep.subr.mxu0 0.0
    %605 = vmatpush1.msra.mxu0 0.0
    %606 = vmatprep.subr.mxu0 0.0
    %607 = vmatpush1.msra.mxu0 0.0
    %608 = vmatprep.subr.mxu0 0.0
    %609 = vmatpush1.msra.mxu0 0.0
    %610 = vmatprep.subr.mxu0 0.0
    %611 = vmatpush1.msra.mxu0 0.0
    %612 = vmatprep.subr.mxu0 0.0
    %613 = vmatpush1.msra.mxu0 0.0
    %614 = vmatprep.subr.mxu0 0.0
    %615 = vmatpush1.msra.mxu0 0.0
    %616 = vmatprep.subr.mxu0 0.0
    %617 = vmatpush1.msra.mxu0 0.0
    %618 = vmatprep.subr.mxu0 0.0
    %619 = vmatpush1.msra.mxu0 0.0
    %620 = vmatprep.subr.mxu0 0.0
    %621 = vmatpush1.msra.mxu0 0.0
    %622 = vmatprep.subr.mxu0 0.0
    %623 = vmatpush1.msra.mxu0 0.0
    %624 = vmatprep.subr.mxu0 0.0
    %625 = vmatpush1.msra.mxu0 0.0
    %626 = vmatprep.subr.mxu0 0.0
    %627 = vmatpush1.msra.mxu0 0.0
    %628 = vmatprep.subr.mxu0 0.0
    %629 = vmatpush1.msra.mxu0 0.0
    %630 = vmatprep.subr.mxu0 0.0
    %631 = vmatpush1.msra.mxu0 0.0
    %632 = vmatprep.subr.mxu0 0.0
    %633 = vmatpush1.msra.mxu0 0.0
    %634 = vmatprep.subr.mxu0 0.0
    %635 = vmatpush1.msra.mxu0 0.0
    %636 = vmatprep.subr.mxu0 0.0
    %637 = vmatpush1.msra.mxu0 0.0
    %638 = vmatprep.subr.mxu0 0.0
    %639 = vmatpush1.msra.mxu0 0.0
    %640 = vmatprep.mubr.f32.mxu0 0.0
    %641 = vmatmul.mubr.f32.gmra.mrb[0].mxu0 %v529
    %v642 = vpop.f32.mrb[0].mxu0
    %v643 = vadd.f32 0.0, %v642
    %v644 = vpop.f32.mrb[0].mxu0
    %645 = vmatprep.mubr.f32.mxu0 0.0
    %646 = vmatmul.mubr.f32.gmra.mrb[0].mxu0 %v532
    %v647 = vpop.f32.mrb[0].mxu0
    %v648 = vadd.f32 0.0, %v647
    %v649 = vpop.f32.mrb[0].mxu0
    %650 = vmatprep.mubr.f32.mxu0 0.0
    %651 = vmatmul.mubr.f32.gmra.mrb[0].mxu0 %v535
    %v652 = vpop.f32.mrb[0].mxu0
    %v653 = vadd.f32 0.0, %v652
    %v654 = vpop.f32.mrb[0].mxu0
    %655 = vmatprep.mubr.f32.mxu0 0.0
    %656 = vmatmul.mubr.f32.gmra.mrb[0].mxu0 %v538
    %v657 = vpop.f32.mrb[0].mxu0
    %v658 = vadd.f32 0.0, %v657
    %v659 = vpop.f32.mrb[0].mxu0
    %660 = vmatprep.mubr.f32.mxu0 0.0
    %661 = vmatmul.mubr.f32.gmra.mrb[0].mxu0 %v541
    %v662 = vpop.f32.mrb[0].mxu0
    %v663 = vadd.f32 0.0, %v662
    %v664 = vpop.f32.mrb[0].mxu0
    %665 = vmatprep.mubr.f32.mxu0 0.0
    %666 = vmatmul.mubr.f32.gmra.mrb[0].mxu0 %v544
    %v667 = vpop.f32.mrb[0].mxu0
    %v668 = vadd.f32 0.0, %v667
    %v669 = vpop.f32.mrb[0].mxu0
    %670 = vmatprep.mubr.f32.mxu0 0.0
    %671 = vmatmul.mubr.f32.gmra.mrb[0].mxu0 %v547
    %v672 = vpop.f32.mrb[0].mxu0
    %v673 = vadd.f32 0.0, %v672
    %v674 = vpop.f32.mrb[0].mxu0
    %675 = vmatprep.mubr.f32.mxu0 0.0
    %676 = vmatmul.mubr.f32.gmra.mrb[0].mxu0 %v550
    %v677 = vpop.f32.mrb[0].mxu0
    %v678 = vadd.f32 0.0, %v677
    %v679 = vpop.f32.mrb[0].mxu0
    %680 = vmatprep.mubr.f32.mxu0 0.0
    %681 = vmatmul.mubr.f32.gmra.mrb[0].mxu0 %v553
    %v682 = vpop.f32.mrb[0].mxu0
    %v683 = vadd.f32 0.0, %v682
    %v684 = vpop.f32.mrb[0].mxu0
    %685 = vmatprep.mubr.f32.mxu0 0.0
    %686 = vmatmul.mubr.f32.gmra.mrb[0].mxu0 %v556
    %v687 = vpop.f32.mrb[0].mxu0
    %v688 = vadd.f32 0.0, %v687
    %v689 = vpop.f32.mrb[0].mxu0
    %690 = vmatprep.mubr.f32.mxu0 0.0
    %691 = vmatmul.mubr.f32.gmra.mrb[0].mxu0 %v559
    %v692 = vpop.f32.mrb[0].mxu0
    %v693 = vadd.f32 0.0, %v692
    %v694 = vpop.f32.mrb[0].mxu0
    %695 = vmatprep.mubr.f32.mxu0 0.0
    %696 = vmatmul.mubr.f32.gmra.mrb[0].mxu0 %v562
    %v697 = vpop.f32.mrb[0].mxu0
    %v698 = vadd.f32 0.0, %v697
    %v699 = vpop.f32.mrb[0].mxu0
    %700 = vmatprep.mubr.f32.mxu0 0.0
    %701 = vmatmul.mubr.f32.gmra.mrb[0].mxu0 %v565
    %v702 = vpop.f32.mrb[0].mxu0
    %v703 = vadd.f32 0.0, %v702
    %v704 = vpop.f32.mrb[0].mxu0
    %705 = vmatprep.mubr.f32.mxu0 0.0
    %706 = vmatmul.mubr.f32.gmra.mrb[0].mxu0 %v568
    %v707 = vpop.f32.mrb[0].mxu0
    %v708 = vadd.f32 0.0, %v707
    %v709 = vpop.f32.mrb[0].mxu0
    %710 = vmatprep.mubr.f32.mxu0 0.0
    %711 = vmatmul.mubr.f32.gmra.mrb[0].mxu0 %v571
    %v712 = vpop.f32.mrb[0].mxu0
    %v713 = vadd.f32 0.0, %v712
    %v714 = vpop.f32.mrb[0].mxu0
    %715 = vmatprep.mubr.f32.mxu0 0.0
    %716 = vmatmul.mubr.f32.gmra.mrb[0].mxu0 %v574
    %v717 = vpop.f32.mrb[0].mxu0
    %v718 = vadd.f32 0.0, %v717
    %v719 = vpop.f32.mrb[0].mxu0
    %720 = vdwg.mxu0
    %721 = vmatprep.subr.mxu0 0.0
    %722 = vmatpush1.msra.mxu0 %v163
    %723 = vmatprep.subr.mxu0 0.0
    %724 = vmatpush1.msra.mxu0 %v170
    %725 = vmatprep.subr.mxu0 0.0
    %726 = vmatpush1.msra.mxu0 0.0
    %727 = vmatprep.subr.mxu0 0.0
    %728 = vmatpush1.msra.mxu0 0.0
    %729 = vmatprep.subr.mxu0 0.0
    %730 = vmatpush1.msra.mxu0 0.0
    %731 = vmatprep.subr.mxu0 0.0
    %732 = vmatpush1.msra.mxu0 0.0
    %733 = vmatprep.subr.mxu0 0.0
    %734 = vmatpush1.msra.mxu0 0.0
    %735 = vmatprep.subr.mxu0 0.0
    %736 = vmatpush1.msra.mxu0 0.0
    %737 = vmatprep.subr.mxu0 0.0
    %738 = vmatpush1.msra.mxu0 0.0
    %739 = vmatprep.subr.mxu0 0.0
    %740 = vmatpush1.msra.mxu0 0.0
    %741 = vmatprep.subr.mxu0 0.0
    %742 = vmatpush1.msra.mxu0 0.0
    %743 = vmatprep.subr.mxu0 0.0
    %744 = vmatpush1.msra.mxu0 0.0
    %745 = vmatprep.subr.mxu0 0.0
    %746 = vmatpush1.msra.mxu0 0.0
    %747 = vmatprep.subr.mxu0 0.0
    %748 = vmatpush1.msra.mxu0 0.0
    %749 = vmatprep.subr.mxu0 0.0
    %750 = vmatpush1.msra.mxu0 0.0
    %751 = vmatprep.subr.mxu0 0.0
    %752 = vmatpush1.msra.mxu0 0.0
    %753 = vmatprep.subr.mxu0 0.0
    %754 = vmatpush1.msra.mxu0 0.0
    %755 = vmatprep.subr.mxu0 0.0
    %756 = vmatpush1.msra.mxu0 0.0
    %757 = vmatprep.subr.mxu0 0.0
    %758 = vmatpush1.msra.mxu0 0.0
    %759 = vmatprep.subr.mxu0 0.0
    %760 = vmatpush1.msra.mxu0 0.0
    %761 = vmatprep.subr.mxu0 0.0
    %762 = vmatpush1.msra.mxu0 0.0
    %763 = vmatprep.subr.mxu0 0.0
    %764 = vmatpush1.msra.mxu0 0.0
    %765 = vmatprep.subr.mxu0 0.0
    %766 = vmatpush1.msra.mxu0 0.0
    %767 = vmatprep.subr.mxu0 0.0
    %768 = vmatpush1.msra.mxu0 0.0
    %769 = vmatprep.subr.mxu0 0.0
    %770 = vmatpush1.msra.mxu0 0.0
    %771 = vmatprep.subr.mxu0 0.0
    %772 = vmatpush1.msra.mxu0 0.0
    %773 = vmatprep.subr.mxu0 0.0
    %774 = vmatpush1.msra.mxu0 0.0
    %775 = vmatprep.subr.mxu0 0.0
    %776 = vmatpush1.msra.mxu0 0.0
    %777 = vmatprep.subr.mxu0 0.0
    %778 = vmatpush1.msra.mxu0 0.0
    %779 = vmatprep.subr.mxu0 0.0
    %780 = vmatpush1.msra.mxu0 0.0
    %781 = vmatprep.subr.mxu0 0.0
    %782 = vmatpush1.msra.mxu0 0.0
    %783 = vmatprep.subr.mxu0 0.0
    %784 = vmatpush1.msra.mxu0 0.0
    %785 = vmatprep.mubr.f32.mxu0 0.0
    %786 = vmatmul.mubr.f32.gmra.mrb[0].mxu0 %v529
    %v787 = vpop.f32.mrb[0].mxu0
    %v788 = vadd.f32 0.0, %v787
    %v789 = vpop.f32.mrb[0].mxu0
    %790 = vmatprep.mubr.f32.mxu0 0.0
    %791 = vmatmul.mubr.f32.gmra.mrb[0].mxu0 %v532
    %v792 = vpop.f32.mrb[0].mxu0
    %v793 = vadd.f32 0.0, %v792
    %v794 = vpop.f32.mrb[0].mxu0
    %795 = vmatprep.mubr.f32.mxu0 0.0
    %796 = vmatmul.mubr.f32.gmra.mrb[0].mxu0 %v535
    %v797 = vpop.f32.mrb[0].mxu0
    %v798 = vadd.f32 0.0, %v797
    %v799 = vpop.f32.mrb[0].mxu0
    %800 = vmatprep.mubr.f32.mxu0 0.0
    %801 = vmatmul.mubr.f32.gmra.mrb[0].mxu0 %v538
    %v802 = vpop.f32.mrb[0].mxu0
    %v803 = vadd.f32 0.0, %v802
    %v804 = vpop.f32.mrb[0].mxu0
    %805 = vmatprep.mubr.f32.mxu0 0.0
    %806 = vmatmul.mubr.f32.gmra.mrb[0].mxu0 %v541
    %v807 = vpop.f32.mrb[0].mxu0
    %v808 = vadd.f32 0.0, %v807
    %v809 = vpop.f32.mrb[0].mxu0
    %810 = vmatprep.mubr.f32.mxu0 0.0
    %811 = vmatmul.mubr.f32.gmra.mrb[0].mxu0 %v544
    %v812 = vpop.f32.mrb[0].mxu0
    %v813 = vadd.f32 0.0, %v812
    %v814 = vpop.f32.mrb[0].mxu0
    %815 = vmatprep.mubr.f32.mxu0 0.0
    %816 = vmatmul.mubr.f32.gmra.mrb[0].mxu0 %v547
    %v817 = vpop.f32.mrb[0].mxu0
    %v818 = vadd.f32 0.0, %v817
    %v819 = vpop.f32.mrb[0].mxu0
    %820 = vmatprep.mubr.f32.mxu0 0.0
    %821 = vmatmul.mubr.f32.gmra.mrb[0].mxu0 %v550
    %v822 = vpop.f32.mrb[0].mxu0
    %v823 = vadd.f32 0.0, %v822
    %v824 = vpop.f32.mrb[0].mxu0
    %825 = vmatprep.mubr.f32.mxu0 0.0
    %826 = vmatmul.mubr.f32.gmra.mrb[0].mxu0 %v553
    %v827 = vpop.f32.mrb[0].mxu0
    %v828 = vadd.f32 0.0, %v827
    %v829 = vpop.f32.mrb[0].mxu0
    %830 = vmatprep.mubr.f32.mxu0 0.0
    %831 = vmatmul.mubr.f32.gmra.mrb[0].mxu0 %v556
    %v832 = vpop.f32.mrb[0].mxu0
    %v833 = vadd.f32 0.0, %v832
    %v834 = vpop.f32.mrb[0].mxu0
    %835 = vmatprep.mubr.f32.mxu0 0.0
    %836 = vmatmul.mubr.f32.gmra.mrb[0].mxu0 %v559
    %v837 = vpop.f32.mrb[0].mxu0
    %v838 = vadd.f32 0.0, %v837
    %v839 = vpop.f32.mrb[0].mxu0
    %840 = vmatprep.mubr.f32.mxu0 0.0
    %841 = vmatmul.mubr.f32.gmra.mrb[0].mxu0 %v562
    %v842 = vpop.f32.mrb[0].mxu0
    %v843 = vadd.f32 0.0, %v842
    %v844 = vpop.f32.mrb[0].mxu0
    %845 = vmatprep.mubr.f32.mxu0 0.0
    %846 = vmatmul.mubr.f32.gmra.mrb[0].mxu0 %v565
    %v847 = vpop.f32.mrb[0].mxu0
    %v848 = vadd.f32 0.0, %v847
    %v849 = vpop.f32.mrb[0].mxu0
    %850 = vmatprep.mubr.f32.mxu0 0.0
    %851 = vmatmul.mubr.f32.gmra.mrb[0].mxu0 %v568
    %v852 = vpop.f32.mrb[0].mxu0
    %v853 = vadd.f32 0.0, %v852
    %v854 = vpop.f32.mrb[0].mxu0
    %855 = vmatprep.mubr.f32.mxu0 0.0
    %856 = vmatmul.mubr.f32.gmra.mrb[0].mxu0 %v571
    %v857 = vpop.f32.mrb[0].mxu0
    %v858 = vadd.f32 0.0, %v857
    %v859 = vpop.f32.mrb[0].mxu0
    %860 = vmatprep.mubr.f32.mxu0 0.0
    %861 = vmatmul.mubr.f32.gmra.mrb[0].mxu0 %v574
    %v862 = vpop.f32.mrb[0].mxu0
    %v863 = vadd.f32 0.0, %v862
    %v864 = vpop.f32.mrb[0].mxu0
    %865 = vdwg.mxu0
    %v866 = vmul.f32 %v643, %v509
    %v867 = vmul.f32 %v648, %v510
    %v868 = vmul.f32 %v653, %v511
    %v869 = vmul.f32 %v658, %v512
    %v870 = vmul.f32 %v663, %v513
    %v871 = vmul.f32 %v668, %v514
    %v872 = vmul.f32 %v673, %v515
    %v873 = vmul.f32 %v678, %v516
    %v874 = vmul.f32 %v683, %v517
    %v875 = vmul.f32 %v688, %v518
    %v876 = vmul.f32 %v693, %v519
    %v877 = vmul.f32 %v698, %v520
    %v878 = vmul.f32 %v703, %v521
    %v879 = vmul.f32 %v708, %v522
    %v880 = vmul.f32 %v713, %v523
    %v881 = vmul.f32 %v718, %v524
    %v882 = vsel %vm527, %v866, 0.0
    %883 = vadd.xlane.f32.xlu0 %v882
    %v884 = vpop.xlane.xlu0 %883
    %v885 = vsel %vm527, %v867, 0.0
    %886 = vadd.xlane.f32.xlu0 %v885
    %v887 = vpop.xlane.xlu0 %886
    %v888 = vsel %vm527, %v868, 0.0
    %889 = vadd.xlane.f32.xlu0 %v888
    %v890 = vpop.xlane.xlu0 %889
    %v891 = vsel %vm527, %v869, 0.0
    %892 = vadd.xlane.f32.xlu0 %v891
    %v893 = vpop.xlane.xlu0 %892
    %v894 = vsel %vm527, %v870, 0.0
    %895 = vadd.xlane.f32.xlu0 %v894
    %v896 = vpop.xlane.xlu0 %895
    %v897 = vsel %vm527, %v871, 0.0
    %898 = vadd.xlane.f32.xlu0 %v897
    %v899 = vpop.xlane.xlu0 %898
    %v900 = vsel %vm527, %v872, 0.0
    %901 = vadd.xlane.f32.xlu0 %v900
    %v902 = vpop.xlane.xlu0 %901
    %v903 = vsel %vm527, %v873, 0.0
    %904 = vadd.xlane.f32.xlu0 %v903
    %v905 = vpop.xlane.xlu0 %904
    %v906 = vsel %vm527, %v874, 0.0
    %907 = vadd.xlane.f32.xlu0 %v906
    %v908 = vpop.xlane.xlu0 %907
    %v909 = vsel %vm527, %v875, 0.0
    %910 = vadd.xlane.f32.xlu0 %v909
    %v911 = vpop.xlane.xlu0 %910
    %v912 = vsel %vm527, %v876, 0.0
    %913 = vadd.xlane.f32.xlu0 %v912
    %v914 = vpop.xlane.xlu0 %913
    %v915 = vsel %vm527, %v877, 0.0
    %916 = vadd.xlane.f32.xlu0 %v915
    %v917 = vpop.xlane.xlu0 %916
    %v918 = vsel %vm527, %v878, 0.0
    %919 = vadd.xlane.f32.xlu0 %v918
    %v920 = vpop.xlane.xlu0 %919
    %v921 = vsel %vm527, %v879, 0.0
    %922 = vadd.xlane.f32.xlu0 %v921
    %v923 = vpop.xlane.xlu0 %922
    %v924 = vsel %vm527, %v880, 0.0
    %925 = vadd.xlane.f32.xlu0 %v924
    %v926 = vpop.xlane.xlu0 %925
    %v927 = vsel %vm527, %v881, 0.0
    %928 = vadd.xlane.f32.xlu0 %v927
    %v929 = vpop.xlane.xlu0 %928
    %v930 = vmul.f32 %v788, %v509
    %v931 = vmul.f32 %v793, %v510
    %v932 = vmul.f32 %v798, %v511
    %v933 = vmul.f32 %v803, %v512
    %v934 = vmul.f32 %v808, %v513
    %v935 = vmul.f32 %v813, %v514
    %v936 = vmul.f32 %v818, %v515
    %v937 = vmul.f32 %v823, %v516
    %v938 = vmul.f32 %v828, %v517
    %v939 = vmul.f32 %v833, %v518
    %v940 = vmul.f32 %v838, %v519
    %v941 = vmul.f32 %v843, %v520
    %v942 = vmul.f32 %v848, %v521
    %v943 = vmul.f32 %v853, %v522
    %v944 = vmul.f32 %v858, %v523
    %v945 = vmul.f32 %v863, %v524
    %v946 = vsel %vm527, %v930, 0.0
    %947 = vadd.xlane.f32.xlu0 %v946
    %v948 = vpop.xlane.xlu0 %947
    %v949 = vsel %vm527, %v931, 0.0
    %950 = vadd.xlane.f32.xlu0 %v949
    %v951 = vpop.xlane.xlu0 %950
    %v952 = vsel %vm527, %v932, 0.0
    %953 = vadd.xlane.f32.xlu0 %v952
    %v954 = vpop.xlane.xlu0 %953
    %v955 = vsel %vm527, %v933, 0.0
    %956 = vadd.xlane.f32.xlu0 %v955
    %v957 = vpop.xlane.xlu0 %956
    %v958 = vsel %vm527, %v934, 0.0
    %959 = vadd.xlane.f32.xlu0 %v958
    %v960 = vpop.xlane.xlu0 %959
    %v961 = vsel %vm527, %v935, 0.0
    %962 = vadd.xlane.f32.xlu0 %v961
    %v963 = vpop.xlane.xlu0 %962
    %v964 = vsel %vm527, %v936, 0.0
    %965 = vadd.xlane.f32.xlu0 %v964
    %v966 = vpop.xlane.xlu0 %965
    %v967 = vsel %vm527, %v937, 0.0
    %968 = vadd.xlane.f32.xlu0 %v967
    %v969 = vpop.xlane.xlu0 %968
    %v970 = vsel %vm527, %v938, 0.0
    %971 = vadd.xlane.f32.xlu0 %v970
    %v972 = vpop.xlane.xlu0 %971
    %v973 = vsel %vm527, %v939, 0.0
    %974 = vadd.xlane.f32.xlu0 %v973
    %v975 = vpop.xlane.xlu0 %974
    %v976 = vsel %vm527, %v940, 0.0
    %977 = vadd.xlane.f32.xlu0 %v976
    %v978 = vpop.xlane.xlu0 %977
    %v979 = vsel %vm527, %v941, 0.0
    %980 = vadd.xlane.f32.xlu0 %v979
    %v981 = vpop.xlane.xlu0 %980
    %v982 = vsel %vm527, %v942, 0.0
    %983 = vadd.xlane.f32.xlu0 %v982
    %v984 = vpop.xlane.xlu0 %983
    %v985 = vsel %vm527, %v943, 0.0
    %986 = vadd.xlane.f32.xlu0 %v985
    %v987 = vpop.xlane.xlu0 %986
    %v988 = vsel %vm527, %v944, 0.0
    %989 = vadd.xlane.f32.xlu0 %v988
    %v990 = vpop.xlane.xlu0 %989
    %v991 = vsel %vm527, %v945, 0.0
    %992 = vadd.xlane.f32.xlu0 %v991
    %v993 = vpop.xlane.xlu0 %992
    %vm994 = vcmp.gt.f32.partialorder %v884, 0.0
    %vm995 = vcmp.gt.f32.partialorder %v887, 0.0
    %vm996 = vcmp.gt.f32.partialorder %v890, 0.0
    %vm997 = vcmp.gt.f32.partialorder %v893, 0.0
    %vm998 = vcmp.gt.f32.partialorder %v896, 0.0
    %vm999 = vcmp.gt.f32.partialorder %v899, 0.0
    %vm1000 = vcmp.gt.f32.partialorder %v902, 0.0
    %vm1001 = vcmp.gt.f32.partialorder %v905, 0.0
    %vm1002 = vcmp.gt.f32.partialorder %v908, 0.0
    %vm1003 = vcmp.gt.f32.partialorder %v911, 0.0
    %vm1004 = vcmp.gt.f32.partialorder %v914, 0.0
    %vm1005 = vcmp.gt.f32.partialorder %v917, 0.0
    %vm1006 = vcmp.gt.f32.partialorder %v920, 0.0
    %vm1007 = vcmp.gt.f32.partialorder %v923, 0.0
    %vm1008 = vcmp.gt.f32.partialorder %v926, 0.0
    %vm1009 = vcmp.gt.f32.partialorder %v929, 0.0
    %v1010 = vsel %vm994, 1, 0
    %v1011 = vsel %vm995, 1, 0
    %v1012 = vsel %vm996, 1, 0
    %v1013 = vsel %vm997, 1, 0
    %v1014 = vsel %vm998, 1, 0
    %v1015 = vsel %vm999, 1, 0
    %v1016 = vsel %vm1000, 1, 0
    %v1017 = vsel %vm1001, 1, 0
    %v1018 = vsel %vm1002, 1, 0
    %v1019 = vsel %vm1003, 1, 0
    %v1020 = vsel %vm1004, 1, 0
    %v1021 = vsel %vm1005, 1, 0
    %v1022 = vsel %vm1006, 1, 0
    %v1023 = vsel %vm1007, 1, 0
    %v1024 = vsel %vm1008, 1, 0
    %v1025 = vsel %vm1009, 1, 0
    %v1026 = vcvt.s32.f32 %v1010
    %v1027 = vcvt.s32.f32 %v1011
    %v1028 = vcvt.s32.f32 %v1012
    %v1029 = vcvt.s32.f32 %v1013
    %v1030 = vcvt.s32.f32 %v1014
    %v1031 = vcvt.s32.f32 %v1015
    %v1032 = vcvt.s32.f32 %v1016
    %v1033 = vcvt.s32.f32 %v1017
    %v1034 = vcvt.s32.f32 %v1018
    %v1035 = vcvt.s32.f32 %v1019
    %v1036 = vcvt.s32.f32 %v1020
    %v1037 = vcvt.s32.f32 %v1021
    %v1038 = vcvt.s32.f32 %v1022
    %v1039 = vcvt.s32.f32 %v1023
    %v1040 = vcvt.s32.f32 %v1024
    %v1041 = vcvt.s32.f32 %v1025
    %v1042 = vmax.f32 %v948, 0.0
    %v1043 = vmax.f32 %v951, 0.0
    %v1044 = vmax.f32 %v954, 0.0
    %v1045 = vmax.f32 %v957, 0.0
    %v1046 = vmax.f32 %v960, 0.0
    %v1047 = vmax.f32 %v963, 0.0
    %v1048 = vmax.f32 %v966, 0.0
    %v1049 = vmax.f32 %v969, 0.0
    %v1050 = vmax.f32 %v972, 0.0
    %v1051 = vmax.f32 %v975, 0.0
    %v1052 = vmax.f32 %v978, 0.0
    %v1053 = vmax.f32 %v981, 0.0
    %v1054 = vmax.f32 %v984, 0.0
    %v1055 = vmax.f32 %v987, 0.0
    %v1056 = vmax.f32 %v990, 0.0
    %v1057 = vmax.f32 %v993, 0.0
    %v1058 = vand.u32 2147483647, %v948
    %v1059 = vand.u32 2147483647, %v951
    %v1060 = vand.u32 2147483647, %v954
    %v1061 = vand.u32 2147483647, %v957
    %v1062 = vand.u32 2147483647, %v960
    %v1063 = vand.u32 2147483647, %v963
    %v1064 = vand.u32 2147483647, %v966
    %v1065 = vand.u32 2147483647, %v969
    %v1066 = vand.u32 2147483647, %v972
    %v1067 = vand.u32 2147483647, %v975
    %v1068 = vand.u32 2147483647, %v978
    %v1069 = vand.u32 2147483647, %v981
    %v1070 = vand.u32 2147483647, %v984
    %v1071 = vand.u32 2147483647, %v987
    %v1072 = vand.u32 2147483647, %v990
    %v1073 = vand.u32 2147483647, %v993
    %v1074 = vsub.f32 0.0, %v1058
    %v1075 = vsub.f32 0.0, %v1059
    %v1076 = vsub.f32 0.0, %v1060
    %v1077 = vsub.f32 0.0, %v1061
    %v1078 = vsub.f32 0.0, %v1062
    %v1079 = vsub.f32 0.0, %v1063
    %v1080 = vsub.f32 0.0, %v1064
    %v1081 = vsub.f32 0.0, %v1065
    %v1082 = vsub.f32 0.0, %v1066
    %v1083 = vsub.f32 0.0, %v1067
    %v1084 = vsub.f32 0.0, %v1068
    %v1085 = vsub.f32 0.0, %v1069
    %v1086 = vsub.f32 0.0, %v1070
    %v1087 = vsub.f32 0.0, %v1071
    %v1088 = vsub.f32 0.0, %v1072
    %v1089 = vsub.f32 0.0, %v1073
    %v1090 = vmul.f32 %v1074, 1.442695
    %v1091 = vpow.pop %v1090
    %v1092 = vmul.f32 %v1075, 1.442695
    %v1093 = vpow.pop %v1092
    %v1094 = vmul.f32 %v1076, 1.442695
    %v1095 = vpow.pop %v1094
    %v1096 = vmul.f32 %v1077, 1.442695
    %v1097 = vpow.pop %v1096
    %v1098 = vmul.f32 %v1078, 1.442695
    %v1099 = vpow.pop %v1098
    %v1100 = vmul.f32 %v1079, 1.442695
    %v1101 = vpow.pop %v1100
    %v1102 = vmul.f32 %v1080, 1.442695
    %v1103 = vpow.pop %v1102
    %v1104 = vmul.f32 %v1081, 1.442695
    %v1105 = vpow.pop %v1104
    %v1106 = vmul.f32 %v1082, 1.442695
    %v1107 = vpow.pop %v1106
    %v1108 = vmul.f32 %v1083, 1.442695
    %v1109 = vpow.pop %v1108
    %v1110 = vmul.f32 %v1084, 1.442695
    %v1111 = vpow.pop %v1110
    %v1112 = vmul.f32 %v1085, 1.442695
    %v1113 = vpow.pop %v1112
    %v1114 = vmul.f32 %v1086, 1.442695
    %v1115 = vpow.pop %v1114
    %v1116 = vmul.f32 %v1087, 1.442695
    %v1117 = vpow.pop %v1116
    %v1118 = vmul.f32 %v1088, 1.442695
    %v1119 = vpow.pop %v1118
    %v1120 = vmul.f32 %v1089, 1.442695
    %v1121 = vpow.pop %v1120
    %v1122 = vadd.f32 %v1091, 1.0
    %v1123 = vadd.f32 %v1093, 1.0
    %v1124 = vadd.f32 %v1095, 1.0
    %v1125 = vadd.f32 %v1097, 1.0
    %v1126 = vadd.f32 %v1099, 1.0
    %v1127 = vadd.f32 %v1101, 1.0
    %v1128 = vadd.f32 %v1103, 1.0
    %v1129 = vadd.f32 %v1105, 1.0
    %v1130 = vadd.f32 %v1107, 1.0
    %v1131 = vadd.f32 %v1109, 1.0
    %v1132 = vadd.f32 %v1111, 1.0
    %v1133 = vadd.f32 %v1113, 1.0
    %v1134 = vadd.f32 %v1115, 1.0
    %v1135 = vadd.f32 %v1117, 1.0
    %v1136 = vadd.f32 %v1119, 1.0
    %v1137 = vadd.f32 %v1121, 1.0
    %v1138 = vlog2.pop %v1122
    %v1139 = vmul.f32 %v1138, 0.6931472
    %v1140 = vlog2.pop %v1123
    %v1141 = vmul.f32 %v1140, 0.6931472
    %v1142 = vlog2.pop %v1124
    %v1143 = vmul.f32 %v1142, 0.6931472
    %v1144 = vlog2.pop %v1125
    %v1145 = vmul.f32 %v1144, 0.6931472
    %v1146 = vlog2.pop %v1126
    %v1147 = vmul.f32 %v1146, 0.6931472
    %v1148 = vlog2.pop %v1127
    %v1149 = vmul.f32 %v1148, 0.6931472
    %v1150 = vlog2.pop %v1128
    %v1151 = vmul.f32 %v1150, 0.6931472
    %v1152 = vlog2.pop %v1129
    %v1153 = vmul.f32 %v1152, 0.6931472
    %v1154 = vlog2.pop %v1130
    %v1155 = vmul.f32 %v1154, 0.6931472
    %v1156 = vlog2.pop %v1131
    %v1157 = vmul.f32 %v1156, 0.6931472
    %v1158 = vlog2.pop %v1132
    %v1159 = vmul.f32 %v1158, 0.6931472
    %v1160 = vlog2.pop %v1133
    %v1161 = vmul.f32 %v1160, 0.6931472
    %v1162 = vlog2.pop %v1134
    %v1163 = vmul.f32 %v1162, 0.6931472
    %v1164 = vlog2.pop %v1135
    %v1165 = vmul.f32 %v1164, 0.6931472
    %v1166 = vlog2.pop %v1136
    %v1167 = vmul.f32 %v1166, 0.6931472
    %v1168 = vlog2.pop %v1137
    %v1169 = vmul.f32 %v1168, 0.6931472
    %v1170 = vadd.f32 %v1042, %v1139
    %v1171 = vadd.f32 %v1043, %v1141
    %v1172 = vadd.f32 %v1044, %v1143
    %v1173 = vadd.f32 %v1045, %v1145
    %v1174 = vadd.f32 %v1046, %v1147
    %v1175 = vadd.f32 %v1047, %v1149
    %v1176 = vadd.f32 %v1048, %v1151
    %v1177 = vadd.f32 %v1049, %v1153
    %v1178 = vadd.f32 %v1050, %v1155
    %v1179 = vadd.f32 %v1051, %v1157
    %v1180 = vadd.f32 %v1052, %v1159
    %v1181 = vadd.f32 %v1053, %v1161
    %v1182 = vadd.f32 %v1054, %v1163
    %v1183 = vadd.f32 %v1055, %v1165
    %v1184 = vadd.f32 %v1056, %v1167
    %v1185 = vadd.f32 %v1057, %v1169
    %v1186 = vmul.f32 %v1026, %v948
    %v1187 = vmul.f32 %v1027, %v951
    %v1188 = vmul.f32 %v1028, %v954
    %v1189 = vmul.f32 %v1029, %v957
    %v1190 = vmul.f32 %v1030, %v960
    %v1191 = vmul.f32 %v1031, %v963
    %v1192 = vmul.f32 %v1032, %v966
    %v1193 = vmul.f32 %v1033, %v969
    %v1194 = vmul.f32 %v1034, %v972
    %v1195 = vmul.f32 %v1035, %v975
    %v1196 = vmul.f32 %v1036, %v978
    %v1197 = vmul.f32 %v1037, %v981
    %v1198 = vmul.f32 %v1038, %v984
    %v1199 = vmul.f32 %v1039, %v987
    %v1200 = vmul.f32 %v1040, %v990
    %v1201 = vmul.f32 %v1041, %v993
    %v1202 = vsub.f32 %v1170, %v1186
    %v1203 = vsub.f32 %v1171, %v1187
    %v1204 = vsub.f32 %v1172, %v1188
    %v1205 = vsub.f32 %v1173, %v1189
    %v1206 = vsub.f32 %v1174, %v1190
    %v1207 = vsub.f32 %v1175, %v1191
    %v1208 = vsub.f32 %v1176, %v1192
    %v1209 = vsub.f32 %v1177, %v1193
    %v1210 = vsub.f32 %v1178, %v1194
    %v1211 = vsub.f32 %v1179, %v1195
    %v1212 = vsub.f32 %v1180, %v1196
    %v1213 = vsub.f32 %v1181, %v1197
    %v1214 = vsub.f32 %v1182, %v1198
    %v1215 = vsub.f32 %v1183, %v1199
    %v1216 = vsub.f32 %v1184, %v1200
    %v1217 = vsub.f32 %v1185, %v1201
    %vm1218 = vcmask 7168
    %v1219 = vsel %vm1218, %v1202, 0.0
    %v1220 = vsel %vm1218, %v1203, 0.0
    %v1221 = vadd.f32 %v1219, %v1220
    %v1222 = vsel %vm1218, %v1204, 0.0
    %v1223 = vadd.f32 %v1221, %v1222
    %v1224 = vsel %vm1218, %v1205, 0.0
    %v1225 = vadd.f32 %v1223, %v1224
    %v1226 = vsel %vm1218, %v1206, 0.0
    %v1227 = vadd.f32 %v1225, %v1226
    %v1228 = vsel %vm1218, %v1207, 0.0
    %v1229 = vadd.f32 %v1227, %v1228
    %v1230 = vsel %vm1218, %v1208, 0.0
    %v1231 = vadd.f32 %v1229, %v1230
    %v1232 = vsel %vm1218, %v1209, 0.0
    %v1233 = vadd.f32 %v1231, %v1232
    %v1234 = vsel %vm1218, %v1210, 0.0
    %v1235 = vadd.f32 %v1233, %v1234
    %v1236 = vsel %vm1218, %v1211, 0.0
    %v1237 = vadd.f32 %v1235, %v1236
    %v1238 = vsel %vm1218, %v1212, 0.0
    %v1239 = vadd.f32 %v1237, %v1238
    %v1240 = vsel %vm1218, %v1213, 0.0
    %v1241 = vadd.f32 %v1239, %v1240
    %v1242 = vsel %vm1218, %v1214, 0.0
    %v1243 = vadd.f32 %v1241, %v1242
    %v1244 = vsel %vm1218, %v1215, 0.0
    %v1245 = vadd.f32 %v1243, %v1244
    %v1246 = vsel %vm1218, %v1216, 0.0
    %v1247 = vadd.f32 %v1245, %v1246
    %v1248 = vsel %vm1218, %v1217, 0.0
    %v1249 = vadd.f32 %v1247, %v1248
    %1250 = vadd.xlane.f32.xlu0 %v1249
    %v1251 = vpop.xlane.xlu0 %1250
    %v1252 = vrot.slane %v1251, 4
    %v1253 = vadd.f32 %v1251, %v1252
    %v1254 = vrot.slane %v1253, 2
    %v1255 = vadd.f32 %v1253, %v1254
    %v1256 = vrot.slane %v1255, 1
    %v1257 = vadd.f32 %v1255, %v1256
    %s1258 = vtos %v1257
    %v1259 = vrcp.pop 128.0
    %s1260 = vtos %v1259
    %s1261 = smul.f32 %s1258, %s1260
    %s1262 = scalar_lea.smem [#allocation2], 0
    %1263 = sst [smem:[%s1262]] %s1261
    // Predicated region
    $region22: #{rank_loss_forward.3} parent=1 // pred_check
      _
    $region23: #{rank_loss_forward.3} parent=1 // pred_check_branch
      %1265 = sbr.rel (0) target = $region25
    $region24: #{rank_loss_forward.3} parent=1 // pred_region
      %s1267 = ssub.s32 16, 16
      %1268 = vsyncadd [#allocation3], %s1267
      %1271 = dma.smem_to_hbm [#allocation2], 16, %s5, [#allocation3]
    $region25: #{rank_loss_forward.3} parent=1 // pred_fallthru
      _
    // Predicated region
    $region26: #{rank_loss_forward.3} parent=1 // pred_check
      _
    $region27: #{rank_loss_forward.3} parent=1 // pred_check_branch
      %1273 = sbr.rel (0) target = $region29
    $region28: #{rank_loss_forward.3} parent=1 // pred_region
      %1274 = dma.done [#allocation3], 16
    $region29: #{rank_loss_forward.3} parent=1 // pred_fallthru
      _
    %1275 = sfence
    %1276 = vsyncpa [#allocation3], 1

</llo_original>
